<compile_context>
chip_gen: v7x
topology: tpu7x:2x2x1
jax: 0.10.0
libtpu: 0.0.40
codegen_flags: <defaults>
</compile_context>

<pallas_src>
import functools

import jax
import jax.numpy as jnp
from jax import lax
from jax.experimental import pallas as pl
from jax.experimental.pallas import tpu as pltpu


def sepconv_kernel(x_ref, wdw_ref, wpw_ref, s1_ref, b1_ref, s2_ref, b2_ref,
                   maskf_ref, out_ref, *, W):
    """SepConv on a (Bt, Cin, H*W) lane-flattened NCHW block.

    x_ref    : (Bt, Cin, HW)   input block, spatial flattened onto lanes
    wdw_ref  : (Cin, 9)        depthwise 3x3 weights, tap-major (dy*3+dx)
    wpw_ref  : (Cout, Cin)     pointwise (1x1) weights
    s1_ref/b1_ref : (Cin, 1)   folded BN1 scale / bias
    s2_ref/b2_ref : (Cout, 1)  folded BN2 scale / bias
    maskf_ref: (9, HW)         f32 zero-pad border masks per tap
    out_ref  : (Bt, Cout, HW)
    """
    Bt, Cin, HW = x_ref.shape

    wdw = wdw_ref[...]                      # (Cin, 9), resident across taps
    wpw = wpw_ref[...]                      # (Cout, Cin)
    s1, b1 = s1_ref[...], b1_ref[...]
    s2, b2 = s2_ref[...], b2_ref[...]

    for b in range(Bt):                     # static unroll, Bt is small
        xb = x_ref[b]                       # (Cin, HW) lane-dense load

        # -- depthwise 3x3 conv (groups=Cin): 8 XLU rolls + masked VPU FMAs --
        acc = None
        for dy in range(3):
            for dx in range(3):
                t = dy * 3 + dx
                s = (dy - 1) * W + (dx - 1)          # flattened spatial shift
                if s == 0:
                    shifted = xb                     # center tap: no roll/mask
                else:
                    shifted = pltpu.roll(xb, shift=(-s) % HW, axis=1)
                    shifted = shifted * maskf_ref[t:t + 1, :]   # zero padding
                contrib = shifted * wdw[:, t:t + 1]  # per-channel tap weight
                acc = contrib if acc is None else acc + contrib

        # -- folded BN1 + ReLU --------------------------------------------
        h = jnp.maximum(acc * s1 + b1, 0.0)          # (Cin, HW)

        # -- pointwise 1x1 conv: one MXU matmul, f32 accumulation ----------
        # TODO(synk): bf16 operands for realistic (>=128) channel counts.
        o = jnp.dot(wpw, h, preferred_element_type=jnp.float32)  # (Cout, HW)

        # -- folded BN2 + ReLU, lane-dense (multiple-of-128) store ---------
        out_ref[b] = jnp.maximum(o * s2 + b2, 0.0)


def fold_bn(gamma, beta, mean, var, eps=1e-5):
    s = gamma / jnp.sqrt(var + eps)
    b = beta - mean * s
    return s, b


def _largest_divisor_leq(n, k):
    for d in range(min(n, k), 0, -1):
        if n % d == 0:
            return d
    return 1


@jax.jit
def sepconv(x_nchw, w_dw, w_pw, s1, b1, s2, b2):
    """x_nchw: (N, Cin, H, W) f32; w_dw: (Cin, 9) tap-major; w_pw: (Cout, Cin);
    s1/b1: (Cin,) and s2/b2: (Cout,) folded BN scale/bias."""
    N, Cin, H, W = x_nchw.shape
    Cout = w_pw.shape[0]
    HW = H * W
    Bt = _largest_divisor_leq(N, 8)          # batch images per grid step

    # Free, contiguous reshape only -- no NCHW<->NHWC HBM transpose passes.
    x_flat = x_nchw.reshape(N, Cin, HW).astype(jnp.float32)

    # Zero-pad border masks for the 9 lane-rolled taps (trace-time constants;
    # tiny, constant index_map -> stays resident in VMEM across grid steps).
    yy, xx = jnp.meshgrid(jnp.arange(H), jnp.arange(W), indexing="ij")
    yy = yy.reshape(HW)
    xx = xx.reshape(HW)
    masks = []
    for dy in range(3):
        for dx in range(3):
            oy, ox = dy - 1, dx - 1
            v = ((yy + oy >= 0) & (yy + oy < H)
                 & (xx + ox >= 0) & (xx + ox < W))
            masks.append(v.astype(jnp.float32))
    maskf = jnp.stack(masks, axis=0)         # (9, HW)

    flops = N * HW * (2 * 9 * Cin + 2 * Cin * Cout)
    bytes_accessed = 4 * (N * HW * Cin + N * HW * Cout + 9 * Cin
                          + Cin * Cout + 2 * (Cin + Cout) + 9 * HW)
    cost = pl.CostEstimate(flops=flops, transcendentals=0,
                           bytes_accessed=bytes_accessed)

    kernel = functools.partial(sepconv_kernel, W=W)

    out_flat = pl.pallas_call(
        kernel,
        out_shape=jax.ShapeDtypeStruct((N, Cout, HW), jnp.float32),
        grid_spec=pltpu.PrefetchScalarGridSpec(
            num_scalar_prefetch=0,
            grid=(N // Bt,),
            in_specs=[
                pl.BlockSpec((Bt, Cin, HW), lambda n: (n, 0, 0)),
                pl.BlockSpec((Cin, 9), lambda n: (0, 0)),
                pl.BlockSpec((Cout, Cin), lambda n: (0, 0)),
                pl.BlockSpec((Cin, 1), lambda n: (0, 0)),
                pl.BlockSpec((Cin, 1), lambda n: (0, 0)),
                pl.BlockSpec((Cout, 1), lambda n: (0, 0)),
                pl.BlockSpec((Cout, 1), lambda n: (0, 0)),
                pl.BlockSpec((9, HW), lambda n: (0, 0)),
            ],
            out_specs=pl.BlockSpec((Bt, Cout, HW), lambda n: (n, 0, 0)),
        ),
        compiler_params=pltpu.CompilerParams(
            dimension_semantics=("parallel",),
            vmem_limit_bytes=32 * 1024 * 1024),
        cost_estimate=cost,
    )(x_flat, w_dw, w_pw,
      s1.reshape(Cin, 1), b1.reshape(Cin, 1),
      s2.reshape(Cout, 1), b2.reshape(Cout, 1),
      maskf)

    return out_flat.reshape(N, Cout, H, W)   # free reshape back to NCHW


def _reference(x_nchw, w_dw_hwio, w_pw_hwio, s1, b1, s2, b2):
    """Pure-JAX reference (lax.conv) for correctness checking."""
    x = jnp.transpose(x_nchw, (0, 2, 3, 1))
    Cin = x.shape[-1]
    dn1 = lax.conv_dimension_numbers(x.shape, w_dw_hwio.shape,
                                     ("NHWC", "HWIO", "NHWC"))
    c1 = lax.conv_general_dilated(x, w_dw_hwio, (1, 1), "SAME",
                                  dimension_numbers=dn1,
                                  feature_group_count=Cin)
    h = jnp.maximum(c1 * s1 + b1, 0.0)
    dn2 = lax.conv_dimension_numbers(h.shape, w_pw_hwio.shape,
                                     ("NHWC", "HWIO", "NHWC"))
    c2 = lax.conv_general_dilated(h, w_pw_hwio, (1, 1), "SAME",
                                  dimension_numbers=dn2)
    o = jnp.maximum(c2 * s2 + b2, 0.0)
    return jnp.transpose(o, (0, 3, 1, 2))


if __name__ == "__main__":
    N, Cin, Cout, H, W = 2, 4, 8, 16, 16
    key = jax.random.PRNGKey(0)
    keys = jax.random.split(key, 11)

    x = jax.random.normal(keys[0], (N, Cin, H, W), jnp.float32)

    # PyTorch weight conventions: dw (Cin, 1, 3, 3), pw (Cout, Cin, 1, 1).
    dw_t = jax.random.normal(keys[1], (Cin, 1, 3, 3), jnp.float32) * 0.3
    pw_t = jax.random.normal(keys[2], (Cout, Cin, 1, 1), jnp.float32) * 0.3

    # Kernel-format weights (free reshapes).
    w_dw = dw_t.reshape(Cin, 9)                       # (Cin, 9) tap-major
    w_pw = pw_t.reshape(Cout, Cin)                    # (Cout, Cin)

    # Reference-format weights.
    w_dw_hwio = jnp.transpose(dw_t, (2, 3, 1, 0))     # (3, 3, 1, Cin)
    w_pw_hwio = jnp.transpose(pw_t, (2, 3, 1, 0))     # (1, 1, Cin, Cout)

    # BatchNorm params / running stats (eval-mode semantics), deterministic.
    g1 = 1.0 + 0.1 * jax.random.normal(keys[3], (Cin,), jnp.float32)
    be1 = 0.1 * jax.random.normal(keys[4], (Cin,), jnp.float32)
    m1 = 0.1 * jax.random.normal(keys[5], (Cin,), jnp.float32)
    v1 = 0.5 + jax.random.uniform(keys[6], (Cin,), jnp.float32)
    g2 = 1.0 + 0.1 * jax.random.normal(keys[7], (Cout,), jnp.float32)
    be2 = 0.1 * jax.random.normal(keys[8], (Cout,), jnp.float32)
    m2 = 0.1 * jax.random.normal(keys[9], (Cout,), jnp.float32)
    v2 = 0.5 + jax.random.uniform(keys[10], (Cout,), jnp.float32)

    s1, b1 = fold_bn(g1, be1, m1, v1)
    s2, b2 = fold_bn(g2, be2, m2, v2)

    out = sepconv(x, w_dw, w_pw, s1, b1, s2, b2)
    out = jax.block_until_ready(out)

    ref = _reference(x, w_dw_hwio, w_pw_hwio, s1, b1, s2, b2)
    assert out.shape == (N, Cout, H, W)
    assert jnp.allclose(out, ref, atol=1e-4, rtol=1e-4), "mismatch vs JAX reference"

    print("KERNEL_OK")
</pallas_src>

<mosaic_0001>
module attributes {stable_mosaic.version = 11 : i64} {
  func.func @sepconv_kernel(%arg0: i32, %arg1: memref<2x4x256xf32, #tpu.memory_space<vmem>>, %arg2: memref<4x9xf32, #tpu.memory_space<vmem>>, %arg3: memref<8x4xf32, #tpu.memory_space<vmem>>, %arg4: memref<4x1xf32, #tpu.memory_space<vmem>>, %arg5: memref<4x1xf32, #tpu.memory_space<vmem>>, %arg6: memref<8x1xf32, #tpu.memory_space<vmem>>, %arg7: memref<8x1xf32, #tpu.memory_space<vmem>>, %arg8: memref<9x256xf32, #tpu.memory_space<vmem>>, %arg9: memref<2x8x256xf32, #tpu.memory_space<vmem>>) attributes {dimension_semantics = [#tpu.dimension_semantics<parallel>], iteration_bounds = array<i64: 1>, scalar_prefetch = 0 : i64, scratch_operands = 0 : i64, tpu.core_type = #tpu.core_type<tc>, window_params = [{transform_indices = @transform_0, window_bounds = array<i64: 2, 4, 256>}, {pipeline_mode = #tpu.pipeline_mode<synchronous>, transform_indices = @transform_1, window_bounds = array<i64: 4, 9>}, {pipeline_mode = #tpu.pipeline_mode<synchronous>, transform_indices = @transform_2, window_bounds = array<i64: 8, 4>}, {pipeline_mode = #tpu.pipeline_mode<synchronous>, transform_indices = @transform_3, window_bounds = array<i64: 4, 1>}, {pipeline_mode = #tpu.pipeline_mode<synchronous>, transform_indices = @transform_4, window_bounds = array<i64: 4, 1>}, {pipeline_mode = #tpu.pipeline_mode<synchronous>, transform_indices = @transform_5, window_bounds = array<i64: 8, 1>}, {pipeline_mode = #tpu.pipeline_mode<synchronous>, transform_indices = @transform_6, window_bounds = array<i64: 8, 1>}, {pipeline_mode = #tpu.pipeline_mode<synchronous>, transform_indices = @transform_7, window_bounds = array<i64: 9, 256>}, {transform_indices = @transform_8, window_bounds = array<i64: 2, 8, 256>}]} {
    %c0 = arith.constant 0 : index
    %c0_0 = arith.constant 0 : index
    %0 = vector.load %arg2[%c0, %c0_0] : memref<4x9xf32, #tpu.memory_space<vmem>>, vector<4x9xf32>
    %c0_1 = arith.constant 0 : index
    %c0_2 = arith.constant 0 : index
    %1 = vector.load %arg3[%c0_1, %c0_2] : memref<8x4xf32, #tpu.memory_space<vmem>>, vector<8x4xf32>
    %c0_3 = arith.constant 0 : index
    %c0_4 = arith.constant 0 : index
    %2 = vector.load %arg4[%c0_3, %c0_4] : memref<4x1xf32, #tpu.memory_space<vmem>>, vector<4x1xf32>
    %c0_5 = arith.constant 0 : index
    %c0_6 = arith.constant 0 : index
    %3 = vector.load %arg5[%c0_5, %c0_6] : memref<4x1xf32, #tpu.memory_space<vmem>>, vector<4x1xf32>
    %c0_7 = arith.constant 0 : index
    %c0_8 = arith.constant 0 : index
    %4 = vector.load %arg6[%c0_7, %c0_8] : memref<8x1xf32, #tpu.memory_space<vmem>>, vector<8x1xf32>
    %c0_9 = arith.constant 0 : index
    %c0_10 = arith.constant 0 : index
    %5 = vector.load %arg7[%c0_9, %c0_10] : memref<8x1xf32, #tpu.memory_space<vmem>>, vector<8x1xf32>
    %c0_11 = arith.constant 0 : index
    %c0_12 = arith.constant 0 : index
    %c0_13 = arith.constant 0 : index
    %6 = vector.load %arg1[%c0_11, %c0_12, %c0_13] : memref<2x4x256xf32, #tpu.memory_space<vmem>>, vector<1x4x256xf32>
    %7 = vector.shape_cast %6 : vector<1x4x256xf32> to vector<4x256xf32>
    %c17_i32 = arith.constant 17 : i32
    %8 = tpu.dynamic_rotate %7 by %c17_i32 dim 1 : vector<4x256xf32>, i32 -> vector<4x256xf32>
    %c0_14 = arith.constant 0 : index
    %c0_15 = arith.constant 0 : index
    %9 = vector.load %arg8[%c0_14, %c0_15] : memref<9x256xf32, #tpu.memory_space<vmem>>, vector<1x256xf32>
    %10 = vector.broadcast %9 : vector<1x256xf32> to vector<4x256xf32>
    %11 = arith.mulf %8, %10 : vector<4x256xf32>
    %12 = vector.extract_strided_slice %0 {offsets = [0, 0], sizes = [4, 1], strides = [1, 1]} : vector<4x9xf32> to vector<4x1xf32>
    %13 = vector.broadcast %12 : vector<4x1xf32> to vector<4x256xf32>
    %14 = arith.mulf %11, %13 : vector<4x256xf32>
    %c16_i32 = arith.constant 16 : i32
    %15 = tpu.dynamic_rotate %7 by %c16_i32 dim 1 : vector<4x256xf32>, i32 -> vector<4x256xf32>
    %c1 = arith.constant 1 : index
    %c0_16 = arith.constant 0 : index
    %16 = vector.load %arg8[%c1, %c0_16] : memref<9x256xf32, #tpu.memory_space<vmem>>, vector<1x256xf32>
    %17 = vector.broadcast %16 : vector<1x256xf32> to vector<4x256xf32>
    %18 = arith.mulf %15, %17 : vector<4x256xf32>
    %19 = vector.extract_strided_slice %0 {offsets = [0, 1], sizes = [4, 1], strides = [1, 1]} : vector<4x9xf32> to vector<4x1xf32>
    %20 = vector.broadcast %19 : vector<4x1xf32> to vector<4x256xf32>
    %21 = arith.mulf %18, %20 : vector<4x256xf32>
    %22 = arith.addf %14, %21 : vector<4x256xf32>
    %c15_i32 = arith.constant 15 : i32
    %23 = tpu.dynamic_rotate %7 by %c15_i32 dim 1 : vector<4x256xf32>, i32 -> vector<4x256xf32>
    %c2 = arith.constant 2 : index
    %c0_17 = arith.constant 0 : index
    %24 = vector.load %arg8[%c2, %c0_17] : memref<9x256xf32, #tpu.memory_space<vmem>>, vector<1x256xf32>
    %25 = vector.broadcast %24 : vector<1x256xf32> to vector<4x256xf32>
    %26 = arith.mulf %23, %25 : vector<4x256xf32>
    %27 = vector.extract_strided_slice %0 {offsets = [0, 2], sizes = [4, 1], strides = [1, 1]} : vector<4x9xf32> to vector<4x1xf32>
    %28 = vector.broadcast %27 : vector<4x1xf32> to vector<4x256xf32>
    %29 = arith.mulf %26, %28 : vector<4x256xf32>
    %30 = arith.addf %22, %29 : vector<4x256xf32>
    %c1_i32 = arith.constant 1 : i32
    %31 = tpu.dynamic_rotate %7 by %c1_i32 dim 1 : vector<4x256xf32>, i32 -> vector<4x256xf32>
    %c3 = arith.constant 3 : index
    %c0_18 = arith.constant 0 : index
    %32 = vector.load %arg8[%c3, %c0_18] : memref<9x256xf32, #tpu.memory_space<vmem>>, vector<1x256xf32>
    %33 = vector.broadcast %32 : vector<1x256xf32> to vector<4x256xf32>
    %34 = arith.mulf %31, %33 : vector<4x256xf32>
    %35 = vector.extract_strided_slice %0 {offsets = [0, 3], sizes = [4, 1], strides = [1, 1]} : vector<4x9xf32> to vector<4x1xf32>
    %36 = vector.broadcast %35 : vector<4x1xf32> to vector<4x256xf32>
    %37 = arith.mulf %34, %36 : vector<4x256xf32>
    %38 = arith.addf %30, %37 : vector<4x256xf32>
    %39 = vector.extract_strided_slice %0 {offsets = [0, 4], sizes = [4, 1], strides = [1, 1]} : vector<4x9xf32> to vector<4x1xf32>
    %40 = vector.broadcast %39 : vector<4x1xf32> to vector<4x256xf32>
    %41 = arith.mulf %7, %40 : vector<4x256xf32>
    %42 = arith.addf %38, %41 : vector<4x256xf32>
    %c255_i32 = arith.constant 255 : i32
    %43 = tpu.dynamic_rotate %7 by %c255_i32 dim 1 : vector<4x256xf32>, i32 -> vector<4x256xf32>
    %c5 = arith.constant 5 : index
    %c0_19 = arith.constant 0 : index
    %44 = vector.load %arg8[%c5, %c0_19] : memref<9x256xf32, #tpu.memory_space<vmem>>, vector<1x256xf32>
    %45 = vector.broadcast %44 : vector<1x256xf32> to vector<4x256xf32>
    %46 = arith.mulf %43, %45 : vector<4x256xf32>
    %47 = vector.extract_strided_slice %0 {offsets = [0, 5], sizes = [4, 1], strides = [1, 1]} : vector<4x9xf32> to vector<4x1xf32>
    %48 = vector.broadcast %47 : vector<4x1xf32> to vector<4x256xf32>
    %49 = arith.mulf %46, %48 : vector<4x256xf32>
    %50 = arith.addf %42, %49 : vector<4x256xf32>
    %c241_i32 = arith.constant 241 : i32
    %51 = tpu.dynamic_rotate %7 by %c241_i32 dim 1 : vector<4x256xf32>, i32 -> vector<4x256xf32>
    %c6 = arith.constant 6 : index
    %c0_20 = arith.constant 0 : index
    %52 = vector.load %arg8[%c6, %c0_20] : memref<9x256xf32, #tpu.memory_space<vmem>>, vector<1x256xf32>
    %53 = vector.broadcast %52 : vector<1x256xf32> to vector<4x256xf32>
    %54 = arith.mulf %51, %53 : vector<4x256xf32>
    %55 = vector.extract_strided_slice %0 {offsets = [0, 6], sizes = [4, 1], strides = [1, 1]} : vector<4x9xf32> to vector<4x1xf32>
    %56 = vector.broadcast %55 : vector<4x1xf32> to vector<4x256xf32>
    %57 = arith.mulf %54, %56 : vector<4x256xf32>
    %58 = arith.addf %50, %57 : vector<4x256xf32>
    %c240_i32 = arith.constant 240 : i32
    %59 = tpu.dynamic_rotate %7 by %c240_i32 dim 1 : vector<4x256xf32>, i32 -> vector<4x256xf32>
    %c7 = arith.constant 7 : index
    %c0_21 = arith.constant 0 : index
    %60 = vector.load %arg8[%c7, %c0_21] : memref<9x256xf32, #tpu.memory_space<vmem>>, vector<1x256xf32>
    %61 = vector.broadcast %60 : vector<1x256xf32> to vector<4x256xf32>
    %62 = arith.mulf %59, %61 : vector<4x256xf32>
    %63 = vector.extract_strided_slice %0 {offsets = [0, 7], sizes = [4, 1], strides = [1, 1]} : vector<4x9xf32> to vector<4x1xf32>
    %64 = vector.broadcast %63 : vector<4x1xf32> to vector<4x256xf32>
    %65 = arith.mulf %62, %64 : vector<4x256xf32>
    %66 = arith.addf %58, %65 : vector<4x256xf32>
    %c239_i32 = arith.constant 239 : i32
    %67 = tpu.dynamic_rotate %7 by %c239_i32 dim 1 : vector<4x256xf32>, i32 -> vector<4x256xf32>
    %c8 = arith.constant 8 : index
    %c0_22 = arith.constant 0 : index
    %68 = vector.load %arg8[%c8, %c0_22] : memref<9x256xf32, #tpu.memory_space<vmem>>, vector<1x256xf32>
    %69 = vector.broadcast %68 : vector<1x256xf32> to vector<4x256xf32>
    %70 = arith.mulf %67, %69 : vector<4x256xf32>
    %71 = vector.extract_strided_slice %0 {offsets = [0, 8], sizes = [4, 1], strides = [1, 1]} : vector<4x9xf32> to vector<4x1xf32>
    %72 = vector.broadcast %71 : vector<4x1xf32> to vector<4x256xf32>
    %73 = arith.mulf %70, %72 : vector<4x256xf32>
    %74 = arith.addf %66, %73 : vector<4x256xf32>
    %75 = vector.broadcast %2 : vector<4x1xf32> to vector<4x256xf32>
    %76 = arith.mulf %74, %75 : vector<4x256xf32>
    %77 = vector.broadcast %3 : vector<4x1xf32> to vector<4x256xf32>
    %78 = arith.addf %76, %77 : vector<4x256xf32>
    %cst = arith.constant 0.000000e+00 : f32
    %79 = vector.broadcast %cst : f32 to vector<4x256xf32>
    %80 = arith.maximumf %78, %79 : vector<4x256xf32>
    %cst_23 = arith.constant dense<0.000000e+00> : vector<8x256xf32>
    %81 = tpu.matmul %1, %80, %cst_23 {dimension_numbers = #tpu.dot_dimension_numbers<[1], [0], [0], [1], [0, 0, 1, 1], [], []>} : vector<8x4xf32>, vector<4x256xf32>, vector<8x256xf32> -> vector<8x256xf32>
    %82 = vector.broadcast %4 : vector<8x1xf32> to vector<8x256xf32>
    %83 = arith.mulf %81, %82 : vector<8x256xf32>
    %84 = vector.broadcast %5 : vector<8x1xf32> to vector<8x256xf32>
    %85 = arith.addf %83, %84 : vector<8x256xf32>
    %cst_24 = arith.constant 0.000000e+00 : f32
    %86 = vector.broadcast %cst_24 : f32 to vector<8x256xf32>
    %87 = arith.maximumf %85, %86 : vector<8x256xf32>
    %c0_25 = arith.constant 0 : index
    %c0_26 = arith.constant 0 : index
    %c0_27 = arith.constant 0 : index
    %88 = vector.load %arg9[%c0_25, %c0_26, %c0_27] : memref<2x8x256xf32, #tpu.memory_space<vmem>>, vector<1x8x256xf32>
    %89 = vector.shape_cast %88 : vector<1x8x256xf32> to vector<8x256xf32>
    %90 = vector.shape_cast %87 : vector<8x256xf32> to vector<1x8x256xf32>
    tpu.vector_store %arg9[%c0_25, %c0_26, %c0_27], %90 {strides = array<i32>} : memref<2x8x256xf32, #tpu.memory_space<vmem>>, vector<1x8x256xf32>,
    %c1_28 = arith.constant 1 : index
    %c0_29 = arith.constant 0 : index
    %c0_30 = arith.constant 0 : index
    %91 = vector.load %arg1[%c1_28, %c0_29, %c0_30] : memref<2x4x256xf32, #tpu.memory_space<vmem>>, vector<1x4x256xf32>
    %92 = vector.shape_cast %91 : vector<1x4x256xf32> to vector<4x256xf32>
    %c17_i32_31 = arith.constant 17 : i32
    %93 = tpu.dynamic_rotate %92 by %c17_i32_31 dim 1 : vector<4x256xf32>, i32 -> vector<4x256xf32>
    %c0_32 = arith.constant 0 : index
    %c0_33 = arith.constant 0 : index
    %94 = vector.load %arg8[%c0_32, %c0_33] : memref<9x256xf32, #tpu.memory_space<vmem>>, vector<1x256xf32>
    %95 = vector.broadcast %94 : vector<1x256xf32> to vector<4x256xf32>
    %96 = arith.mulf %93, %95 : vector<4x256xf32>
    %97 = vector.extract_strided_slice %0 {offsets = [0, 0], sizes = [4, 1], strides = [1, 1]} : vector<4x9xf32> to vector<4x1xf32>
    %98 = vector.broadcast %97 : vector<4x1xf32> to vector<4x256xf32>
    %99 = arith.mulf %96, %98 : vector<4x256xf32>
    %c16_i32_34 = arith.constant 16 : i32
    %100 = tpu.dynamic_rotate %92 by %c16_i32_34 dim 1 : vector<4x256xf32>, i32 -> vector<4x256xf32>
    %c1_35 = arith.constant 1 : index
    %c0_36 = arith.constant 0 : index
    %101 = vector.load %arg8[%c1_35, %c0_36] : memref<9x256xf32, #tpu.memory_space<vmem>>, vector<1x256xf32>
    %102 = vector.broadcast %101 : vector<1x256xf32> to vector<4x256xf32>
    %103 = arith.mulf %100, %102 : vector<4x256xf32>
    %104 = vector.extract_strided_slice %0 {offsets = [0, 1], sizes = [4, 1], strides = [1, 1]} : vector<4x9xf32> to vector<4x1xf32>
    %105 = vector.broadcast %104 : vector<4x1xf32> to vector<4x256xf32>
    %106 = arith.mulf %103, %105 : vector<4x256xf32>
    %107 = arith.addf %99, %106 : vector<4x256xf32>
    %c15_i32_37 = arith.constant 15 : i32
    %108 = tpu.dynamic_rotate %92 by %c15_i32_37 dim 1 : vector<4x256xf32>, i32 -> vector<4x256xf32>
    %c2_38 = arith.constant 2 : index
    %c0_39 = arith.constant 0 : index
    %109 = vector.load %arg8[%c2_38, %c0_39] : memref<9x256xf32, #tpu.memory_space<vmem>>, vector<1x256xf32>
    %110 = vector.broadcast %109 : vector<1x256xf32> to vector<4x256xf32>
    %111 = arith.mulf %108, %110 : vector<4x256xf32>
    %112 = vector.extract_strided_slice %0 {offsets = [0, 2], sizes = [4, 1], strides = [1, 1]} : vector<4x9xf32> to vector<4x1xf32>
    %113 = vector.broadcast %112 : vector<4x1xf32> to vector<4x256xf32>
    %114 = arith.mulf %111, %113 : vector<4x256xf32>
    %115 = arith.addf %107, %114 : vector<4x256xf32>
    %c1_i32_40 = arith.constant 1 : i32
    %116 = tpu.dynamic_rotate %92 by %c1_i32_40 dim 1 : vector<4x256xf32>, i32 -> vector<4x256xf32>
    %c3_41 = arith.constant 3 : index
    %c0_42 = arith.constant 0 : index
    %117 = vector.load %arg8[%c3_41, %c0_42] : memref<9x256xf32, #tpu.memory_space<vmem>>, vector<1x256xf32>
    %118 = vector.broadcast %117 : vector<1x256xf32> to vector<4x256xf32>
    %119 = arith.mulf %116, %118 : vector<4x256xf32>
    %120 = vector.extract_strided_slice %0 {offsets = [0, 3], sizes = [4, 1], strides = [1, 1]} : vector<4x9xf32> to vector<4x1xf32>
    %121 = vector.broadcast %120 : vector<4x1xf32> to vector<4x256xf32>
    %122 = arith.mulf %119, %121 : vector<4x256xf32>
    %123 = arith.addf %115, %122 : vector<4x256xf32>
    %124 = vector.extract_strided_slice %0 {offsets = [0, 4], sizes = [4, 1], strides = [1, 1]} : vector<4x9xf32> to vector<4x1xf32>
    %125 = vector.broadcast %124 : vector<4x1xf32> to vector<4x256xf32>
    %126 = arith.mulf %92, %125 : vector<4x256xf32>
    %127 = arith.addf %123, %126 : vector<4x256xf32>
    %c255_i32_43 = arith.constant 255 : i32
    %128 = tpu.dynamic_rotate %92 by %c255_i32_43 dim 1 : vector<4x256xf32>, i32 -> vector<4x256xf32>
    %c5_44 = arith.constant 5 : index
    %c0_45 = arith.constant 0 : index
    %129 = vector.load %arg8[%c5_44, %c0_45] : memref<9x256xf32, #tpu.memory_space<vmem>>, vector<1x256xf32>
    %130 = vector.broadcast %129 : vector<1x256xf32> to vector<4x256xf32>
    %131 = arith.mulf %128, %130 : vector<4x256xf32>
    %132 = vector.extract_strided_slice %0 {offsets = [0, 5], sizes = [4, 1], strides = [1, 1]} : vector<4x9xf32> to vector<4x1xf32>
    %133 = vector.broadcast %132 : vector<4x1xf32> to vector<4x256xf32>
    %134 = arith.mulf %131, %133 : vector<4x256xf32>
    %135 = arith.addf %127, %134 : vector<4x256xf32>
    %c241_i32_46 = arith.constant 241 : i32
    %136 = tpu.dynamic_rotate %92 by %c241_i32_46 dim 1 : vector<4x256xf32>, i32 -> vector<4x256xf32>
    %c6_47 = arith.constant 6 : index
    %c0_48 = arith.constant 0 : index
    %137 = vector.load %arg8[%c6_47, %c0_48] : memref<9x256xf32, #tpu.memory_space<vmem>>, vector<1x256xf32>
    %138 = vector.broadcast %137 : vector<1x256xf32> to vector<4x256xf32>
    %139 = arith.mulf %136, %138 : vector<4x256xf32>
    %140 = vector.extract_strided_slice %0 {offsets = [0, 6], sizes = [4, 1], strides = [1, 1]} : vector<4x9xf32> to vector<4x1xf32>
    %141 = vector.broadcast %140 : vector<4x1xf32> to vector<4x256xf32>
    %142 = arith.mulf %139, %141 : vector<4x256xf32>
    %143 = arith.addf %135, %142 : vector<4x256xf32>
    %c240_i32_49 = arith.constant 240 : i32
    %144 = tpu.dynamic_rotate %92 by %c240_i32_49 dim 1 : vector<4x256xf32>, i32 -> vector<4x256xf32>
    %c7_50 = arith.constant 7 : index
    %c0_51 = arith.constant 0 : index
    %145 = vector.load %arg8[%c7_50, %c0_51] : memref<9x256xf32, #tpu.memory_space<vmem>>, vector<1x256xf32>
    %146 = vector.broadcast %145 : vector<1x256xf32> to vector<4x256xf32>
    %147 = arith.mulf %144, %146 : vector<4x256xf32>
    %148 = vector.extract_strided_slice %0 {offsets = [0, 7], sizes = [4, 1], strides = [1, 1]} : vector<4x9xf32> to vector<4x1xf32>
    %149 = vector.broadcast %148 : vector<4x1xf32> to vector<4x256xf32>
    %150 = arith.mulf %147, %149 : vector<4x256xf32>
    %151 = arith.addf %143, %150 : vector<4x256xf32>
    %c239_i32_52 = arith.constant 239 : i32
    %152 = tpu.dynamic_rotate %92 by %c239_i32_52 dim 1 : vector<4x256xf32>, i32 -> vector<4x256xf32>
    %c8_53 = arith.constant 8 : index
    %c0_54 = arith.constant 0 : index
    %153 = vector.load %arg8[%c8_53, %c0_54] : memref<9x256xf32, #tpu.memory_space<vmem>>, vector<1x256xf32>
    %154 = vector.broadcast %153 : vector<1x256xf32> to vector<4x256xf32>
    %155 = arith.mulf %152, %154 : vector<4x256xf32>
    %156 = vector.extract_strided_slice %0 {offsets = [0, 8], sizes = [4, 1], strides = [1, 1]} : vector<4x9xf32> to vector<4x1xf32>
    %157 = vector.broadcast %156 : vector<4x1xf32> to vector<4x256xf32>
    %158 = arith.mulf %155, %157 : vector<4x256xf32>
    %159 = arith.addf %151, %158 : vector<4x256xf32>
    %160 = vector.broadcast %2 : vector<4x1xf32> to vector<4x256xf32>
    %161 = arith.mulf %159, %160 : vector<4x256xf32>
    %162 = vector.broadcast %3 : vector<4x1xf32> to vector<4x256xf32>
    %163 = arith.addf %161, %162 : vector<4x256xf32>
    %cst_55 = arith.constant 0.000000e+00 : f32
    %164 = vector.broadcast %cst_55 : f32 to vector<4x256xf32>
    %165 = arith.maximumf %163, %164 : vector<4x256xf32>
    %cst_56 = arith.constant dense<0.000000e+00> : vector<8x256xf32>
    %166 = tpu.matmul %1, %165, %cst_56 {dimension_numbers = #tpu.dot_dimension_numbers<[1], [0], [0], [1], [0, 0, 1, 1], [], []>} : vector<8x4xf32>, vector<4x256xf32>, vector<8x256xf32> -> vector<8x256xf32>
    %167 = vector.broadcast %4 : vector<8x1xf32> to vector<8x256xf32>
    %168 = arith.mulf %166, %167 : vector<8x256xf32>
    %169 = vector.broadcast %5 : vector<8x1xf32> to vector<8x256xf32>
    %170 = arith.addf %168, %169 : vector<8x256xf32>
    %cst_57 = arith.constant 0.000000e+00 : f32
    %171 = vector.broadcast %cst_57 : f32 to vector<8x256xf32>
    %172 = arith.maximumf %170, %171 : vector<8x256xf32>
    %c1_58 = arith.constant 1 : index
    %c0_59 = arith.constant 0 : index
    %c0_60 = arith.constant 0 : index
    %173 = vector.load %arg9[%c1_58, %c0_59, %c0_60] : memref<2x8x256xf32, #tpu.memory_space<vmem>>, vector<1x8x256xf32>
    %174 = vector.shape_cast %173 : vector<1x8x256xf32> to vector<8x256xf32>
    %175 = vector.shape_cast %172 : vector<8x256xf32> to vector<1x8x256xf32>
    tpu.vector_store %arg9[%c1_58, %c0_59, %c0_60], %175 {strides = array<i32>} : memref<2x8x256xf32, #tpu.memory_space<vmem>>, vector<1x8x256xf32>,
    return
  }
  func.func @transform_0(%arg0: i32) -> (i32, i32, i32) {
    %c0_i32 = arith.constant 0 : i32
    %c0_i32_0 = arith.constant 0 : i32
    %c0_i32_1 = arith.constant 0 : i32
    return %arg0, %c0_i32, %c0_i32_0 : i32, i32, i32
  }
  func.func @transform_1(%arg0: i32) -> (i32, i32) {
    %c0_i32 = arith.constant 0 : i32
    %c0_i32_0 = arith.constant 0 : i32
    %c0_i32_1 = arith.constant 0 : i32
    return %c0_i32, %c0_i32_0 : i32, i32
  }
  func.func @transform_2(%arg0: i32) -> (i32, i32) {
    %c0_i32 = arith.constant 0 : i32
    %c0_i32_0 = arith.constant 0 : i32
    %c0_i32_1 = arith.constant 0 : i32
    return %c0_i32, %c0_i32_0 : i32, i32
  }
  func.func @transform_3(%arg0: i32) -> (i32, i32) {
    %c0_i32 = arith.constant 0 : i32
    %c0_i32_0 = arith.constant 0 : i32
    %c0_i32_1 = arith.constant 0 : i32
    return %c0_i32, %c0_i32_0 : i32, i32
  }
  func.func @transform_4(%arg0: i32) -> (i32, i32) {
    %c0_i32 = arith.constant 0 : i32
    %c0_i32_0 = arith.constant 0 : i32
    %c0_i32_1 = arith.constant 0 : i32
    return %c0_i32, %c0_i32_0 : i32, i32
  }
  func.func @transform_5(%arg0: i32) -> (i32, i32) {
    %c0_i32 = arith.constant 0 : i32
    %c0_i32_0 = arith.constant 0 : i32
    %c0_i32_1 = arith.constant 0 : i32
    return %c0_i32, %c0_i32_0 : i32, i32
  }
  func.func @transform_6(%arg0: i32) -> (i32, i32) {
    %c0_i32 = arith.constant 0 : i32
    %c0_i32_0 = arith.constant 0 : i32
    %c0_i32_1 = arith.constant 0 : i32
    return %c0_i32, %c0_i32_0 : i32, i32
  }
  func.func @transform_7(%arg0: i32) -> (i32, i32) {
    %c0_i32 = arith.constant 0 : i32
    %c0_i32_0 = arith.constant 0 : i32
    %c0_i32_1 = arith.constant 0 : i32
    return %c0_i32, %c0_i32_0 : i32, i32
  }
  func.func @transform_8(%arg0: i32) -> (i32, i32, i32) {
    %c0_i32 = arith.constant 0 : i32
    %c0_i32_0 = arith.constant 0 : i32
    %c0_i32_1 = arith.constant 0 : i32
    return %arg0, %c0_i32, %c0_i32_0 : i32, i32, i32
  }
}

</mosaic_0001>

<llo_original>
// kernel: sepconv.1
$region0: #{sepconv.1}
  #allocation0 [shape = 'u32[]', space=smem, size = 0x4, offset = 0x4, fixed_abs, tag = 'smem constant byte address 0x4 - core index']
  #allocation1 [shape = 'u32[144,128]{1,0:T(1,128)}', space=vmem, size = 0x12000, scoped, tag = 'internal scratch']
  %s0 = inlined_call_operand.vmem [shape: f32[2,4,256], index: 0, kind: input, shape index: {}]
  %s1 = inlined_call_operand.vmem [shape: f32[4,9], index: 1, kind: input, shape index: {}]
  %s2 = inlined_call_operand.vmem [shape: f32[8,4], index: 2, kind: input, shape index: {}]
  %s3 = inlined_call_operand.vmem [shape: f32[4,1], index: 3, kind: input, shape index: {}]
  %s4 = inlined_call_operand.vmem [shape: f32[4,1], index: 4, kind: input, shape index: {}]
  %s5 = inlined_call_operand.vmem [shape: f32[8,1], index: 5, kind: input, shape index: {}]
  %s6 = inlined_call_operand.vmem [shape: f32[8,1], index: 6, kind: input, shape index: {}]
  %s7 = inlined_call_operand.vmem [shape: f32[9,256], index: 7, kind: input, shape index: {}]
  %s8 = inlined_call_operand.vmem [shape: f32[2,8,256], index: 8, kind: output, shape index: {}]
  %s9 = sld [smem:[#allocation0]]
  $region42: #{sepconv.1} parent=0
    _
  %s11 = ssub.s32 1, %s9
  %s12 = scalar_select 0, %s11, %s9
  // Predicated region
  $region2: #{sepconv.1} parent=0 // pred_check
    _
  $region3: #{sepconv.1} parent=0 // pred_check_branch
    %14 = sbr.rel (0) target = $region5
  $region4: #{sepconv.1} parent=0 // pred_region
    _
  $region5: #{sepconv.1} parent=0 // pred_fallthru
    _
  // Predicated region
  $region6: #{sepconv.1} parent=0 // pred_check
    _
  $region7: #{sepconv.1} parent=0 // pred_check_branch
    %16 = sbr.rel (0) target = $region9
  $region8: #{sepconv.1} parent=0 // pred_region
    _
  $region9: #{sepconv.1} parent=0 // pred_fallthru
    _
  // Predicated region
  $region10: #{sepconv.1} parent=0 // pred_check
    _
  $region11: #{sepconv.1} parent=0 // pred_check_branch
    %18 = sbr.rel (0) target = $region13
  $region12: #{sepconv.1} parent=0 // pred_region
    _
  $region13: #{sepconv.1} parent=0 // pred_fallthru
    _
  // Predicated region
  $region14: #{sepconv.1} parent=0 // pred_check
    _
  $region15: #{sepconv.1} parent=0 // pred_check_branch
    %20 = sbr.rel (0) target = $region17
  $region16: #{sepconv.1} parent=0 // pred_region
    _
  $region17: #{sepconv.1} parent=0 // pred_fallthru
    _
  // Predicated region
  $region18: #{sepconv.1} parent=0 // pred_check
    _
  $region19: #{sepconv.1} parent=0 // pred_check_branch
    %22 = sbr.rel (0) target = $region21
  $region20: #{sepconv.1} parent=0 // pred_region
    _
  $region21: #{sepconv.1} parent=0 // pred_fallthru
    _
  // Predicated region
  $region22: #{sepconv.1} parent=0 // pred_check
    _
  $region23: #{sepconv.1} parent=0 // pred_check_branch
    %24 = sbr.rel (0) target = $region25
  $region24: #{sepconv.1} parent=0 // pred_region
    _
  $region25: #{sepconv.1} parent=0 // pred_fallthru
    _
  // Predicated region
  $region26: #{sepconv.1} parent=0 // pred_check
    _
  $region27: #{sepconv.1} parent=0 // pred_check_branch
    %26 = sbr.rel (0) target = $region29
  $region28: #{sepconv.1} parent=0 // pred_region
    _
  $region29: #{sepconv.1} parent=0 // pred_fallthru
    _
  // Predicated region
  $region30: #{sepconv.1} parent=0 // pred_check
    _
  $region31: #{sepconv.1} parent=0 // pred_check_branch
    %28 = sbr.rel (0) target = $region33
  $region32: #{sepconv.1} parent=0 // pred_region
    _
  $region33: #{sepconv.1} parent=0 // pred_fallthru
    _
  %v29 = vld [vmem:[%s1] sm:$0xf]
  %v30 = vld [vmem:[%s2] sm:$0xff]
  %v31 = vld [vmem:[%s3] sm:$0xf]
  %v32 = vld [vmem:[%s4] sm:$0xf]
  %v33 = vld [vmem:[%s5] sm:$0xff]
  %v34 = vld [vmem:[%s6] sm:$0xff]
  %v35 = vld [vmem:[%s0] sm:$0xff]
  %v37 = vcombine.high %v35, %v35
  %39 = vrot.lane.b32.xlu0 %v35, 17
  %v40 = vpop.permute.xlu0 %39
  %41 = vrot.lane.b32.xlu0 %v37, 17
  %v42 = vpop.permute.xlu0 %41
  %v43 = vlaneseq
  %v44 = vand.u32 %v43, 127
  %vm45 = vcmp.lt.s32.totalorder %v44, 17
  %v46 = vsel %vm45, %v40, %v42
  %v47 = vsel %vm45, %v42, %v40
  %v48 = vld [vmem:[%s7] ss:$8 sm:$0x3]
  %v50 = vlaneseq
  %v51 = vshrl.u32 %v50, 7
  %v52 = vsub.s32 0, %v51
  %v53 = vrot.slane %v48, %v52
  %v54 = vlaneseq
  %v55 = vshrl.u32 %v54, 7
  %v56 = vsub.s32 1, %v55
  %v57 = vrot.slane %v48, %v56
  %v60 = vmul.f32 %v47, %v53
  %v61 = vmul.f32 %v46, %v57
  %63 = vset.pattern.permute.xlu0 0
  %64 = vperm.xlu0 %63, %v29
  %v65 = vpop.permute.xlu0 %64
  %v67 = vmul.f32 %v60, %v65
  %v68 = vmul.f32 %v61, %v65
  %69 = vrot.lane.b32.xlu0 %v35, 16
  %v70 = vpop.permute.xlu0 %69
  %71 = vrot.lane.b32.xlu0 %v37, 16
  %v72 = vpop.permute.xlu0 %71
  %vm73 = vcmp.lt.s32.totalorder %v44, 16
  %v74 = vsel %vm73, %v70, %v72
  %v75 = vsel %vm73, %v72, %v70
  %s76 = scalar_lea.vmem %s7, 1
  %v77 = vld [vmem:[%s76] ss:$8 sm:$0x3]
  %v79 = vlaneseq
  %v80 = vshrl.u32 %v79, 7
  %v81 = vsub.s32 0, %v80
  %v82 = vrot.slane %v77, %v81
  %v83 = vlaneseq
  %v84 = vshrl.u32 %v83, 7
  %v85 = vsub.s32 1, %v84
  %v86 = vrot.slane %v77, %v85
  %v89 = vmul.f32 %v75, %v82
  %v90 = vmul.f32 %v74, %v86
  %91 = vset.pattern.permute.xlu0 1
  %92 = vperm.xlu0 %91, %v29
  %v93 = vpop.permute.xlu0 %92
  %v95 = vmul.f32 %v89, %v93
  %v96 = vmul.f32 %v90, %v93
  %v97 = vadd.f32 %v67, %v95
  %v98 = vadd.f32 %v68, %v96
  %99 = vrot.lane.b32.xlu0 %v35, 15
  %v100 = vpop.permute.xlu0 %99
  %101 = vrot.lane.b32.xlu0 %v37, 15
  %v102 = vpop.permute.xlu0 %101
  %vm103 = vcmp.lt.s32.totalorder %v44, 15
  %v104 = vsel %vm103, %v100, %v102
  %v105 = vsel %vm103, %v102, %v100
  %s106 = scalar_lea.vmem %s7, 2
  %v107 = vld [vmem:[%s106] ss:$8 sm:$0x3]
  %v109 = vlaneseq
  %v110 = vshrl.u32 %v109, 7
  %v111 = vsub.s32 0, %v110
  %v112 = vrot.slane %v107, %v111
  %v113 = vlaneseq
  %v114 = vshrl.u32 %v113, 7
  %v115 = vsub.s32 1, %v114
  %v116 = vrot.slane %v107, %v115
  %v119 = vmul.f32 %v105, %v112
  %v120 = vmul.f32 %v104, %v116
  %121 = vset.pattern.permute.xlu0 2
  %122 = vperm.xlu0 %121, %v29
  %v123 = vpop.permute.xlu0 %122
  %v125 = vmul.f32 %v119, %v123
  %v126 = vmul.f32 %v120, %v123
  %v127 = vadd.f32 %v97, %v125
  %v128 = vadd.f32 %v98, %v126
  %129 = vrot.lane.b32.xlu0 %v35, 1
  %v130 = vpop.permute.xlu0 %129
  %131 = vrot.lane.b32.xlu0 %v37, 1
  %v132 = vpop.permute.xlu0 %131
  %vm133 = vcmp.lt.s32.totalorder %v44, 1
  %v134 = vsel %vm133, %v130, %v132
  %v135 = vsel %vm133, %v132, %v130
  %s136 = scalar_lea.vmem %s7, 3
  %v137 = vld [vmem:[%s136] ss:$8 sm:$0x3]
  %v139 = vlaneseq
  %v140 = vshrl.u32 %v139, 7
  %v141 = vsub.s32 0, %v140
  %v142 = vrot.slane %v137, %v141
  %v143 = vlaneseq
  %v144 = vshrl.u32 %v143, 7
  %v145 = vsub.s32 1, %v144
  %v146 = vrot.slane %v137, %v145
  %v149 = vmul.f32 %v135, %v142
  %v150 = vmul.f32 %v134, %v146
  %151 = vset.pattern.permute.xlu0 3
  %152 = vperm.xlu0 %151, %v29
  %v153 = vpop.permute.xlu0 %152
  %v155 = vmul.f32 %v149, %v153
  %v156 = vmul.f32 %v150, %v153
  %v157 = vadd.f32 %v127, %v155
  %v158 = vadd.f32 %v128, %v156
  %159 = vset.pattern.permute.xlu0 4
  %160 = vperm.xlu0 %159, %v29
  %v161 = vpop.permute.xlu0 %160
  %v163 = vunpack.c.l.s4 839922192
  %v164 = vunpack.c.0.s8 %v163
  %v165 = vlaneseq
  %v166 = vshrl.u32 %v165, 7
  %v167 = vsub.s32 %v164, %v166
  %v168 = vrot.slane %v161, %v167
  %v170 = vmul.f32 %v35, %v168
  %v172 = vcombine.high %v170, %v170
  %v174 = vadd.f32 %v157, %v170
  %v175 = vadd.f32 %v158, %v172
  %176 = vrot.lane.b32.xlu0 %v35, 127
  %v177 = vpop.permute.xlu0 %176
  %178 = vrot.lane.b32.xlu0 %v37, 127
  %v179 = vpop.permute.xlu0 %178
  %vm180 = vcmp.lt.s32.totalorder %v44, 127
  %v181 = vsel %vm180, %v177, %v179
  %v182 = vsel %vm180, %v179, %v177
  %s183 = scalar_lea.vmem %s7, 5
  %v184 = vld [vmem:[%s183] ss:$8 sm:$0x3]
  %v186 = vlaneseq
  %v187 = vshrl.u32 %v186, 7
  %v188 = vsub.s32 0, %v187
  %v189 = vrot.slane %v184, %v188
  %v190 = vlaneseq
  %v191 = vshrl.u32 %v190, 7
  %v192 = vsub.s32 1, %v191
  %v193 = vrot.slane %v184, %v192
  %v196 = vmul.f32 %v181, %v189
  %v197 = vmul.f32 %v182, %v193
  %198 = vset.pattern.permute.xlu0 5
  %199 = vperm.xlu0 %198, %v29
  %v200 = vpop.permute.xlu0 %199
  %v202 = vmul.f32 %v196, %v200
  %v203 = vmul.f32 %v197, %v200
  %v204 = vadd.f32 %v174, %v202
  %v205 = vadd.f32 %v175, %v203
  %206 = vrot.lane.b32.xlu0 %v35, 113
  %v207 = vpop.permute.xlu0 %206
  %208 = vrot.lane.b32.xlu0 %v37, 113
  %v209 = vpop.permute.xlu0 %208
  %vm210 = vcmp.lt.s32.totalorder %v44, 113
  %v211 = vsel %vm210, %v207, %v209
  %v212 = vsel %vm210, %v209, %v207
  %s213 = scalar_lea.vmem %s7, 6
  %v214 = vld [vmem:[%s213] ss:$8 sm:$0x3]
  %v216 = vlaneseq
  %v217 = vshrl.u32 %v216, 7
  %v218 = vsub.s32 0, %v217
  %v219 = vrot.slane %v214, %v218
  %v220 = vlaneseq
  %v221 = vshrl.u32 %v220, 7
  %v222 = vsub.s32 1, %v221
  %v223 = vrot.slane %v214, %v222
  %v226 = vmul.f32 %v211, %v219
  %v227 = vmul.f32 %v212, %v223
  %228 = vset.pattern.permute.xlu0 6
  %229 = vperm.xlu0 %228, %v29
  %v230 = vpop.permute.xlu0 %229
  %v232 = vmul.f32 %v226, %v230
  %v233 = vmul.f32 %v227, %v230
  %v234 = vadd.f32 %v204, %v232
  %v235 = vadd.f32 %v205, %v233
  %236 = vrot.lane.b32.xlu0 %v35, 112
  %v237 = vpop.permute.xlu0 %236
  %238 = vrot.lane.b32.xlu0 %v37, 112
  %v239 = vpop.permute.xlu0 %238
  %vm240 = vcmp.lt.s32.totalorder %v44, 112
  %v241 = vsel %vm240, %v237, %v239
  %v242 = vsel %vm240, %v239, %v237
  %s243 = scalar_lea.vmem %s7, 7
  %v244 = vld [vmem:[%s243] ss:$8 sm:$0x3]
  %v246 = vlaneseq
  %v247 = vshrl.u32 %v246, 7
  %v248 = vsub.s32 0, %v247
  %v249 = vrot.slane %v244, %v248
  %v250 = vlaneseq
  %v251 = vshrl.u32 %v250, 7
  %v252 = vsub.s32 1, %v251
  %v253 = vrot.slane %v244, %v252
  %v256 = vmul.f32 %v241, %v249
  %v257 = vmul.f32 %v242, %v253
  %258 = vset.pattern.permute.xlu0 7
  %259 = vperm.xlu0 %258, %v29
  %v260 = vpop.permute.xlu0 %259
  %v262 = vmul.f32 %v256, %v260
  %v263 = vmul.f32 %v257, %v260
  %v264 = vadd.f32 %v234, %v262
  %v265 = vadd.f32 %v235, %v263
  %266 = vrot.lane.b32.xlu0 %v35, 111
  %v267 = vpop.permute.xlu0 %266
  %268 = vrot.lane.b32.xlu0 %v37, 111
  %v269 = vpop.permute.xlu0 %268
  %vm270 = vcmp.lt.s32.totalorder %v44, 111
  %v271 = vsel %vm270, %v267, %v269
  %v272 = vsel %vm270, %v269, %v267
  %s273 = scalar_lea.vmem %s7, 16
  %v274 = vld [vmem:[%s273] ss:$8 sm:$0x3]
  %v276 = vlaneseq
  %v277 = vshrl.u32 %v276, 7
  %v278 = vsub.s32 0, %v277
  %v279 = vrot.slane %v274, %v278
  %v280 = vlaneseq
  %v281 = vshrl.u32 %v280, 7
  %v282 = vsub.s32 1, %v281
  %v283 = vrot.slane %v274, %v282
  %v286 = vmul.f32 %v271, %v279
  %v287 = vmul.f32 %v272, %v283
  %288 = vset.pattern.permute.xlu0 8
  %289 = vperm.xlu0 %288, %v29
  %v290 = vpop.permute.xlu0 %289
  %v292 = vmul.f32 %v286, %v290
  %v293 = vmul.f32 %v287, %v290
  %v294 = vadd.f32 %v264, %v292
  %v295 = vadd.f32 %v265, %v293
  %297 = vset.pattern.permute.xlu0 0
  %298 = vperm.xlu0 %297, %v31
  %v299 = vpop.permute.xlu0 %298
  %v301 = vmul.f32 %v294, %v299
  %v302 = vmul.f32 %v295, %v299
  %304 = vset.pattern.permute.xlu0 0
  %305 = vperm.xlu0 %304, %v32
  %v306 = vpop.permute.xlu0 %305
  %v308 = vadd.f32 %v301, %v306
  %v309 = vadd.f32 %v302, %v306
  %v310 = vmax.f32 %v308, 0.0
  %v311 = vmax.f32 %v309, 0.0
  %vm312 = vcmask 31744
  %v314 = vsel %vm312, %v30, 0
  %vm316 = vcmask 1043456
  %v318 = vsel %vm316, %v310, 0
  %v321 = vsel %vm316, %v311, 0
  %323 = vmatprep.subr.mxu0 %v321
  %324 = vmatpush1.msra.mxu0 %v318
  %325 = vmatprep.subr.mxu0 0.0
  %326 = vmatpush1.msra.mxu0 0.0
  %327 = vmatprep.subr.mxu0 0.0
  %328 = vmatpush1.msra.mxu0 0.0
  %329 = vmatprep.subr.mxu0 0.0
  %330 = vmatpush1.msra.mxu0 0.0
  %331 = vmatprep.subr.mxu0 0.0
  %332 = vmatpush1.msra.mxu0 0.0
  %333 = vmatprep.subr.mxu0 0.0
  %334 = vmatpush1.msra.mxu0 0.0
  %335 = vmatprep.subr.mxu0 0.0
  %336 = vmatpush1.msra.mxu0 0.0
  %337 = vmatprep.subr.mxu0 0.0
  %338 = vmatpush1.msra.mxu0 0.0
  %339 = vmatprep.subr.mxu0 0.0
  %340 = vmatpush1.msra.mxu0 0.0
  %341 = vmatprep.subr.mxu0 0.0
  %342 = vmatpush1.msra.mxu0 0.0
  %343 = vmatprep.subr.mxu0 0.0
  %344 = vmatpush1.msra.mxu0 0.0
  %345 = vmatprep.subr.mxu0 0.0
  %346 = vmatpush1.msra.mxu0 0.0
  %347 = vmatprep.subr.mxu0 0.0
  %348 = vmatpush1.msra.mxu0 0.0
  %349 = vmatprep.subr.mxu0 0.0
  %350 = vmatpush1.msra.mxu0 0.0
  %351 = vmatprep.subr.mxu0 0.0
  %352 = vmatpush1.msra.mxu0 0.0
  %353 = vmatprep.subr.mxu0 0.0
  %354 = vmatpush1.msra.mxu0 0.0
  %355 = vmatprep.subr.mxu0 0.0
  %356 = vmatpush1.msra.mxu0 0.0
  %357 = vmatprep.subr.mxu0 0.0
  %358 = vmatpush1.msra.mxu0 0.0
  %359 = vmatprep.subr.mxu0 0.0
  %360 = vmatpush1.msra.mxu0 0.0
  %361 = vmatprep.subr.mxu0 0.0
  %362 = vmatpush1.msra.mxu0 0.0
  %363 = vmatprep.subr.mxu0 0.0
  %364 = vmatpush1.msra.mxu0 0.0
  %365 = vmatprep.subr.mxu0 0.0
  %366 = vmatpush1.msra.mxu0 0.0
  %367 = vmatprep.subr.mxu0 0.0
  %368 = vmatpush1.msra.mxu0 0.0
  %369 = vmatprep.subr.mxu0 0.0
  %370 = vmatpush1.msra.mxu0 0.0
  %371 = vmatprep.subr.mxu0 0.0
  %372 = vmatpush1.msra.mxu0 0.0
  %373 = vmatprep.subr.mxu0 0.0
  %374 = vmatpush1.msra.mxu0 0.0
  %375 = vmatprep.subr.mxu0 0.0
  %376 = vmatpush1.msra.mxu0 0.0
  %377 = vmatprep.subr.mxu0 0.0
  %378 = vmatpush1.msra.mxu0 0.0
  %379 = vmatprep.subr.mxu0 0.0
  %380 = vmatpush1.msra.mxu0 0.0
  %381 = vmatprep.subr.mxu0 0.0
  %382 = vmatpush1.msra.mxu0 0.0
  %383 = vmatprep.subr.mxu0 0.0
  %384 = vmatpush1.msra.mxu0 0.0
  %385 = vmatprep.subr.mxu0 0.0
  %386 = vmatpush1.msra.mxu0 0.0
  %387 = vmatprep.mubr.f32.mxu0 0.0
  %388 = vmatmul.mubr.f32.gmra.mrb[0].mxu0 %v314
  %v389 = vpop.f32.mrb[0].mxu0
  %v390 = vadd.f32 0.0, %v389
  %v391 = vpop.f32.mrb[0].mxu0
  %v392 = vadd.f32 0.0, %v391
  %393 = vdwg.mxu0
  %395 = vset.pattern.permute.xlu0 0
  %396 = vperm.xlu0 %395, %v33
  %v397 = vpop.permute.xlu0 %396
  %v399 = vmul.f32 %v390, %v397
  %v400 = vmul.f32 %v392, %v397
  %402 = vset.pattern.permute.xlu0 0
  %403 = vperm.xlu0 %402, %v34
  %v404 = vpop.permute.xlu0 %403
  %v406 = vadd.f32 %v399, %v404
  %v407 = vadd.f32 %v400, %v404
  %v408 = vmax.f32 %v406, 0.0
  %v409 = vmax.f32 %v407, 0.0
  %410 = vst [vmem:[%s8] sm:$0xff] %v408
  %411 = vst [vmem:[%s8 + $0x8] sm:$0xff] %v409
  %s412 = scalar_lea.vmem %s0, 8
  %v413 = vld [vmem:[%s412] sm:$0xff]
  %v415 = vcombine.high %v413, %v413
  %417 = vrot.lane.b32.xlu0 %v413, 17
  %v418 = vpop.permute.xlu0 %417
  %419 = vrot.lane.b32.xlu0 %v415, 17
  %v420 = vpop.permute.xlu0 %419
  %v421 = vsel %vm45, %v418, %v420
  %v422 = vsel %vm45, %v420, %v418
  %v423 = vld [vmem:[%s7] ss:$8 sm:$0x3]
  %v425 = vlaneseq
  %v426 = vshrl.u32 %v425, 7
  %v427 = vsub.s32 0, %v426
  %v428 = vrot.slane %v423, %v427
  %v429 = vlaneseq
  %v430 = vshrl.u32 %v429, 7
  %v431 = vsub.s32 1, %v430
  %v432 = vrot.slane %v423, %v431
  %v435 = vmul.f32 %v422, %v428
  %v436 = vmul.f32 %v421, %v432
  %v437 = vmul.f32 %v435, %v65
  %v438 = vmul.f32 %v436, %v65
  %439 = vrot.lane.b32.xlu0 %v413, 16
  %v440 = vpop.permute.xlu0 %439
  %441 = vrot.lane.b32.xlu0 %v415, 16
  %v442 = vpop.permute.xlu0 %441
  %v443 = vsel %vm73, %v440, %v442
  %v444 = vsel %vm73, %v442, %v440
  %v445 = vld [vmem:[%s76] ss:$8 sm:$0x3]
  %v447 = vlaneseq
  %v448 = vshrl.u32 %v447, 7
  %v449 = vsub.s32 0, %v448
  %v450 = vrot.slane %v445, %v449
  %v451 = vlaneseq
  %v452 = vshrl.u32 %v451, 7
  %v453 = vsub.s32 1, %v452
  %v454 = vrot.slane %v445, %v453
  %v457 = vmul.f32 %v444, %v450
  %v458 = vmul.f32 %v443, %v454
  %v459 = vmul.f32 %v457, %v93
  %v460 = vmul.f32 %v458, %v93
  %v461 = vadd.f32 %v437, %v459
  %v462 = vadd.f32 %v438, %v460
  %463 = vrot.lane.b32.xlu0 %v413, 15
  %v464 = vpop.permute.xlu0 %463
  %465 = vrot.lane.b32.xlu0 %v415, 15
  %v466 = vpop.permute.xlu0 %465
  %v467 = vsel %vm103, %v464, %v466
  %v468 = vsel %vm103, %v466, %v464
  %v469 = vld [vmem:[%s106] ss:$8 sm:$0x3]
  %v471 = vlaneseq
  %v472 = vshrl.u32 %v471, 7
  %v473 = vsub.s32 0, %v472
  %v474 = vrot.slane %v469, %v473
  %v475 = vlaneseq
  %v476 = vshrl.u32 %v475, 7
  %v477 = vsub.s32 1, %v476
  %v478 = vrot.slane %v469, %v477
  %v481 = vmul.f32 %v468, %v474
  %v482 = vmul.f32 %v467, %v478
  %v483 = vmul.f32 %v481, %v123
  %v484 = vmul.f32 %v482, %v123
  %v485 = vadd.f32 %v461, %v483
  %v486 = vadd.f32 %v462, %v484
  %487 = vrot.lane.b32.xlu0 %v413, 1
  %v488 = vpop.permute.xlu0 %487
  %489 = vrot.lane.b32.xlu0 %v415, 1
  %v490 = vpop.permute.xlu0 %489
  %v491 = vsel %vm133, %v488, %v490
  %v492 = vsel %vm133, %v490, %v488
  %v493 = vld [vmem:[%s136] ss:$8 sm:$0x3]
  %v495 = vlaneseq
  %v496 = vshrl.u32 %v495, 7
  %v497 = vsub.s32 0, %v496
  %v498 = vrot.slane %v493, %v497
  %v499 = vlaneseq
  %v500 = vshrl.u32 %v499, 7
  %v501 = vsub.s32 1, %v500
  %v502 = vrot.slane %v493, %v501
  %v505 = vmul.f32 %v492, %v498
  %v506 = vmul.f32 %v491, %v502
  %v507 = vmul.f32 %v505, %v153
  %v508 = vmul.f32 %v506, %v153
  %v509 = vadd.f32 %v485, %v507
  %v510 = vadd.f32 %v486, %v508
  %v511 = vmul.f32 %v413, %v168
  %v513 = vcombine.high %v511, %v511
  %v515 = vadd.f32 %v509, %v511
  %v516 = vadd.f32 %v510, %v513
  %517 = vrot.lane.b32.xlu0 %v413, 127
  %v518 = vpop.permute.xlu0 %517
  %519 = vrot.lane.b32.xlu0 %v415, 127
  %v520 = vpop.permute.xlu0 %519
  %v521 = vsel %vm180, %v518, %v520
  %v522 = vsel %vm180, %v520, %v518
  %v523 = vld [vmem:[%s183] ss:$8 sm:$0x3]
  %v525 = vlaneseq
  %v526 = vshrl.u32 %v525, 7
  %v527 = vsub.s32 0, %v526
  %v528 = vrot.slane %v523, %v527
  %v529 = vlaneseq
  %v530 = vshrl.u32 %v529, 7
  %v531 = vsub.s32 1, %v530
  %v532 = vrot.slane %v523, %v531
  %v535 = vmul.f32 %v521, %v528
  %v536 = vmul.f32 %v522, %v532
  %v537 = vmul.f32 %v535, %v200
  %v538 = vmul.f32 %v536, %v200
  %v539 = vadd.f32 %v515, %v537
  %v540 = vadd.f32 %v516, %v538
  %541 = vrot.lane.b32.xlu0 %v413, 113
  %v542 = vpop.permute.xlu0 %541
  %543 = vrot.lane.b32.xlu0 %v415, 113
  %v544 = vpop.permute.xlu0 %543
  %v545 = vsel %vm210, %v542, %v544
  %v546 = vsel %vm210, %v544, %v542
  %v547 = vld [vmem:[%s213] ss:$8 sm:$0x3]
  %v549 = vlaneseq
  %v550 = vshrl.u32 %v549, 7
  %v551 = vsub.s32 0, %v550
  %v552 = vrot.slane %v547, %v551
  %v553 = vlaneseq
  %v554 = vshrl.u32 %v553, 7
  %v555 = vsub.s32 1, %v554
  %v556 = vrot.slane %v547, %v555
  %v559 = vmul.f32 %v545, %v552
  %v560 = vmul.f32 %v546, %v556
  %v561 = vmul.f32 %v559, %v230
  %v562 = vmul.f32 %v560, %v230
  %v563 = vadd.f32 %v539, %v561
  %v564 = vadd.f32 %v540, %v562
  %565 = vrot.lane.b32.xlu0 %v413, 112
  %v566 = vpop.permute.xlu0 %565
  %567 = vrot.lane.b32.xlu0 %v415, 112
  %v568 = vpop.permute.xlu0 %567
  %v569 = vsel %vm240, %v566, %v568
  %v570 = vsel %vm240, %v568, %v566
  %v571 = vld [vmem:[%s243] ss:$8 sm:$0x3]
  %v573 = vlaneseq
  %v574 = vshrl.u32 %v573, 7
  %v575 = vsub.s32 0, %v574
  %v576 = vrot.slane %v571, %v575
  %v577 = vlaneseq
  %v578 = vshrl.u32 %v577, 7
  %v579 = vsub.s32 1, %v578
  %v580 = vrot.slane %v571, %v579
  %v583 = vmul.f32 %v569, %v576
  %v584 = vmul.f32 %v570, %v580
  %v585 = vmul.f32 %v583, %v260
  %v586 = vmul.f32 %v584, %v260
  %v587 = vadd.f32 %v563, %v585
  %v588 = vadd.f32 %v564, %v586
  %589 = vrot.lane.b32.xlu0 %v413, 111
  %v590 = vpop.permute.xlu0 %589
  %591 = vrot.lane.b32.xlu0 %v415, 111
  %v592 = vpop.permute.xlu0 %591
  %v593 = vsel %vm270, %v590, %v592
  %v594 = vsel %vm270, %v592, %v590
  %v595 = vld [vmem:[%s273] ss:$8 sm:$0x3]
  %v597 = vlaneseq
  %v598 = vshrl.u32 %v597, 7
  %v599 = vsub.s32 0, %v598
  %v600 = vrot.slane %v595, %v599
  %v601 = vlaneseq
  %v602 = vshrl.u32 %v601, 7
  %v603 = vsub.s32 1, %v602
  %v604 = vrot.slane %v595, %v603
  %v607 = vmul.f32 %v593, %v600
  %v608 = vmul.f32 %v594, %v604
  %v609 = vmul.f32 %v607, %v290
  %v610 = vmul.f32 %v608, %v290
  %v611 = vadd.f32 %v587, %v609
  %v612 = vadd.f32 %v588, %v610
  %v613 = vmul.f32 %v611, %v299
  %v614 = vmul.f32 %v612, %v299
  %v615 = vadd.f32 %v613, %v306
  %v616 = vadd.f32 %v614, %v306
  %v617 = vmax.f32 %v615, 0.0
  %v618 = vmax.f32 %v616, 0.0
  %v620 = vsel %vm316, %v617, 0
  %v623 = vsel %vm316, %v618, 0
  %625 = vmatprep.subr.mxu0 %v623
  %626 = vmatpush1.msra.mxu0 %v620
  %627 = vmatprep.subr.mxu0 0.0
  %628 = vmatpush1.msra.mxu0 0.0
  %629 = vmatprep.subr.mxu0 0.0
  %630 = vmatpush1.msra.mxu0 0.0
  %631 = vmatprep.subr.mxu0 0.0
  %632 = vmatpush1.msra.mxu0 0.0
  %633 = vmatprep.subr.mxu0 0.0
  %634 = vmatpush1.msra.mxu0 0.0
  %635 = vmatprep.subr.mxu0 0.0
  %636 = vmatpush1.msra.mxu0 0.0
  %637 = vmatprep.subr.mxu0 0.0
  %638 = vmatpush1.msra.mxu0 0.0
  %639 = vmatprep.subr.mxu0 0.0
  %640 = vmatpush1.msra.mxu0 0.0
  %641 = vmatprep.subr.mxu0 0.0
  %642 = vmatpush1.msra.mxu0 0.0
  %643 = vmatprep.subr.mxu0 0.0
  %644 = vmatpush1.msra.mxu0 0.0
  %645 = vmatprep.subr.mxu0 0.0
  %646 = vmatpush1.msra.mxu0 0.0
  %647 = vmatprep.subr.mxu0 0.0
  %648 = vmatpush1.msra.mxu0 0.0
  %649 = vmatprep.subr.mxu0 0.0
  %650 = vmatpush1.msra.mxu0 0.0
  %651 = vmatprep.subr.mxu0 0.0
  %652 = vmatpush1.msra.mxu0 0.0
  %653 = vmatprep.subr.mxu0 0.0
  %654 = vmatpush1.msra.mxu0 0.0
  %655 = vmatprep.subr.mxu0 0.0
  %656 = vmatpush1.msra.mxu0 0.0
  %657 = vmatprep.subr.mxu0 0.0
  %658 = vmatpush1.msra.mxu0 0.0
  %659 = vmatprep.subr.mxu0 0.0
  %660 = vmatpush1.msra.mxu0 0.0
  %661 = vmatprep.subr.mxu0 0.0
  %662 = vmatpush1.msra.mxu0 0.0
  %663 = vmatprep.subr.mxu0 0.0
  %664 = vmatpush1.msra.mxu0 0.0
  %665 = vmatprep.subr.mxu0 0.0
  %666 = vmatpush1.msra.mxu0 0.0
  %667 = vmatprep.subr.mxu0 0.0
  %668 = vmatpush1.msra.mxu0 0.0
  %669 = vmatprep.subr.mxu0 0.0
  %670 = vmatpush1.msra.mxu0 0.0
  %671 = vmatprep.subr.mxu0 0.0
  %672 = vmatpush1.msra.mxu0 0.0
  %673 = vmatprep.subr.mxu0 0.0
  %674 = vmatpush1.msra.mxu0 0.0
  %675 = vmatprep.subr.mxu0 0.0
  %676 = vmatpush1.msra.mxu0 0.0
  %677 = vmatprep.subr.mxu0 0.0
  %678 = vmatpush1.msra.mxu0 0.0
  %679 = vmatprep.subr.mxu0 0.0
  %680 = vmatpush1.msra.mxu0 0.0
  %681 = vmatprep.subr.mxu0 0.0
  %682 = vmatpush1.msra.mxu0 0.0
  %683 = vmatprep.subr.mxu0 0.0
  %684 = vmatpush1.msra.mxu0 0.0
  %685 = vmatprep.subr.mxu0 0.0
  %686 = vmatpush1.msra.mxu0 0.0
  %687 = vmatprep.subr.mxu0 0.0
  %688 = vmatpush1.msra.mxu0 0.0
  %689 = vmatprep.mubr.f32.mxu0 0.0
  %690 = vmatmul.mubr.f32.gmra.mrb[0].mxu0 %v314
  %v691 = vpop.f32.mrb[0].mxu0
  %v692 = vadd.f32 0.0, %v691
  %v693 = vpop.f32.mrb[0].mxu0
  %v694 = vadd.f32 0.0, %v693
  %695 = vdwg.mxu0
  %v696 = vmul.f32 %v692, %v397
  %v697 = vmul.f32 %v694, %v397
  %v698 = vadd.f32 %v696, %v404
  %v699 = vadd.f32 %v697, %v404
  %v700 = vmax.f32 %v698, 0.0
  %v701 = vmax.f32 %v699, 0.0
  %s702 = scalar_lea.vmem %s8, 16
  %703 = vst [vmem:[%s702] sm:$0xff] %v700
  %704 = vst [vmem:[%s702 + $0x8] sm:$0xff] %v701
  // Predicated region
  $region34: #{sepconv.1} parent=0 // pred_check
    _
  $region35: #{sepconv.1} parent=0 // pred_check_branch
    %706 = sbr.rel (0) target = $region37
  $region36: #{sepconv.1} parent=0 // pred_region
    _
  $region37: #{sepconv.1} parent=0 // pred_fallthru
    _
  // Predicated region
  $region38: #{sepconv.1} parent=0 // pred_check
    _
  $region39: #{sepconv.1} parent=0 // pred_check_branch
    %708 = sbr.rel (0) target = $region41
  $region40: #{sepconv.1} parent=0 // pred_region
    _
  $region41: #{sepconv.1} parent=0 // pred_fallthru
    _

</llo_original>
